<compile_context>
chip_gen: v7x
topology: tpu7x:2x2x1
jax: 0.10.0
libtpu: 0.0.40
codegen_flags: <defaults>
</compile_context>

<pallas_src>
import functools

import numpy as np
import jax
import jax.numpy as jnp
from jax.experimental import pallas as pl
from jax.experimental.pallas import tpu as pltpu


# ---------------------------------------------------------------------------
# Constant operator construction (equivalent of setweights + the linear part
# of F.interpolate) — done once on the host, independent of batch size.
# ---------------------------------------------------------------------------
def _gauss1d(ks, std):
    """scipy.signal.gaussian(ks, std), normalized to sum 1 (1D factor of gkern)."""
    n = np.arange(ks, dtype=np.float64) - (ks - 1) / 2.0
    g = np.exp(-0.5 * (n / std) ** 2)
    return (g / g.sum()).astype(np.float32)


def _blur_matrix(n, g):
    """Toeplitz matrix of a 'same' (zero-padded) 1D cross-correlation with g."""
    ks = g.shape[0]
    p = ks // 2
    m = np.zeros((n, n), np.float32)
    for i in range(n):
        for k in range(ks):
            j = i - p + k
            if 0 <= j < n:
                m[i, j] += g[k]
    return m


def _interp_matrix(n_out, n_in):
    """1D bilinear interpolation matrix, align_corners=True semantics."""
    m = np.zeros((n_out, n_in), np.float32)
    if n_out == 1:
        m[0, 0] = 1.0
        return m
    for i in range(n_out):
        src = i * (n_in - 1) / (n_out - 1)
        i0 = min(max(int(np.floor(src)), 0), n_in - 1)
        i1 = min(i0 + 1, n_in - 1)
        f = src - i0
        m[i, i0] += 1.0 - f
        m[i, i1] += f
    return m


# ---------------------------------------------------------------------------
# Pallas kernel: per (n, c) image, out = Mh @ x @ MwT  (two MXU matmuls)
# ---------------------------------------------------------------------------
def _gauss_down_kernel(x_ref, mh_ref, mwT_ref, o_ref):
    # x_ref: (H, W)  mh_ref: (Hout, H)  mwT_ref: (W, Wout)  o_ref: (Hout, Wout)
    t = jnp.dot(mh_ref[...], x_ref[...], preferred_element_type=jnp.float32)
    o_ref[...] = jnp.dot(t, mwT_ref[...],
                         preferred_element_type=jnp.float32).astype(o_ref.dtype)


def gaussian_smoothing_downsampling(x, sz, *, ks=5, std=1.5):
    """x: (N, C, H, W) float32; sz = (out_w, out_h) as in the PyTorch forward.

    Returns (N, C, sz[1], sz[0]) float32, matching
        F.conv2d(x, gaussian_kernel, groups=C, padding=ks//2) followed by
        F.interpolate(..., size=(sz[1], sz[0]), mode='bilinear',
                      align_corners=True).
    """
    N, C, H, W = x.shape
    w_out, h_out = int(sz[0]), int(sz[1])

    g = _gauss1d(ks, std)
    mh = jnp.asarray(_interp_matrix(h_out, H) @ _blur_matrix(H, g))        # (Hout, H)
    mwT = jnp.asarray((_interp_matrix(w_out, W) @ _blur_matrix(W, g)).T)   # (W, Wout)

    return pl.pallas_call(
        _gauss_down_kernel,
        out_shape=jax.ShapeDtypeStruct((N, C, h_out, w_out), jnp.float32),
        grid_spec=pltpu.PrefetchScalarGridSpec(
            num_scalar_prefetch=0,
            grid=(N, C),
            in_specs=[
                # one (H, W) image per grid step; N, C dims squeezed away
                pl.BlockSpec((None, None, H, W), lambda n, c: (n, c, 0, 0)),
                # constant operator matrices: same block every step -> stay resident
                pl.BlockSpec((h_out, H), lambda n, c: (0, 0)),
                pl.BlockSpec((W, w_out), lambda n, c: (0, 0)),
            ],
            out_specs=pl.BlockSpec((None, None, h_out, w_out),
                                   lambda n, c: (n, c, 0, 0)),
        ),
        compiler_params=pltpu.CompilerParams(
            dimension_semantics=("parallel", "parallel")),
    )(x, mh, mwT)


# ---------------------------------------------------------------------------
# Pure-JAX reference (literal blur-then-bilinear, computed a different way:
# shifted-add depthwise conv + gather-based interpolation) for correctness.
# ---------------------------------------------------------------------------
def gaussian_smoothing_downsampling_ref(x, sz, *, ks=5, std=1.5):
    N, C, H, W = x.shape
    w_out, h_out = int(sz[0]), int(sz[1])
    g1 = jnp.asarray(_gauss1d(ks, std))
    g2 = jnp.outer(g1, g1)
    g2 = g2 / jnp.sum(g2)
    p = ks // 2

    xp = jnp.pad(x, ((0, 0), (0, 0), (p, p), (p, p)))
    blur = jnp.zeros_like(x)
    for kh in range(ks):
        for kw in range(ks):
            blur = blur + g2[kh, kw] * xp[:, :, kh:kh + H, kw:kw + W]

    def coords(n_out, n_in):
        if n_out == 1:
            return jnp.zeros((1,), jnp.float32)
        return jnp.arange(n_out, dtype=jnp.float32) * ((n_in - 1) / (n_out - 1))

    sh = coords(h_out, H)
    sw = coords(w_out, W)
    h0 = jnp.clip(jnp.floor(sh).astype(jnp.int32), 0, H - 1)
    h1 = jnp.minimum(h0 + 1, H - 1)
    fh = (sh - h0.astype(jnp.float32)).reshape(1, 1, h_out, 1)
    w0 = jnp.clip(jnp.floor(sw).astype(jnp.int32), 0, W - 1)
    w1 = jnp.minimum(w0 + 1, W - 1)
    fw = (sw - w0.astype(jnp.float32)).reshape(1, 1, 1, w_out)

    rows = blur[:, :, h0, :] * (1.0 - fh) + blur[:, :, h1, :] * fh
    out = rows[:, :, :, w0] * (1.0 - fw) + rows[:, :, :, w1] * fw
    return out


# ---------------------------------------------------------------------------
if __name__ == "__main__":
    # Small shapes consistent with the module: batch=2, channels=4, spatial=16,
    # Gaussian kernel ks=5 / std=1.5 (setweights), target size sz=(w_out, h_out).
    N, C, H, W = 2, 4, 16, 16
    ks, std = 5, 1.5
    sz = (8, 12)   # -> output spatial (sz[1], sz[0]) = (12, 8)

    key = jax.random.PRNGKey(0)
    x = jax.random.normal(key, (N, C, H, W), jnp.float32)

    out = jax.block_until_ready(
        gaussian_smoothing_downsampling(x, sz, ks=ks, std=std))
    ref = jax.block_until_ready(
        gaussian_smoothing_downsampling_ref(x, sz, ks=ks, std=std))

    assert out.shape == (N, C, sz[1], sz[0]), out.shape
    max_err = float(jnp.max(jnp.abs(out - ref)))
    assert jnp.allclose(out, ref, atol=1e-4, rtol=1e-4), f"max abs err {max_err}"

    print("KERNEL_OK")
</pallas_src>

<mosaic_0001>
module attributes {stable_mosaic.version = 11 : i64} {
  func.func @_gauss_down_kernel(%arg0: i32, %arg1: i32, %arg2: memref<1x1x16x16xf32, #tpu.memory_space<vmem>>, %arg3: memref<12x16xf32, #tpu.memory_space<vmem>>, %arg4: memref<16x8xf32, #tpu.memory_space<vmem>>, %arg5: memref<1x1x12x8xf32, #tpu.memory_space<vmem>>) attributes {dimension_semantics = [#tpu.dimension_semantics<parallel>, #tpu.dimension_semantics<parallel>], iteration_bounds = array<i64: 2, 4>, scalar_prefetch = 0 : i64, scratch_operands = 0 : i64, tpu.core_type = #tpu.core_type<tc>, window_params = [{transform_indices = @transform_0, window_bounds = array<i64: 1, 1, 16, 16>}, {pipeline_mode = #tpu.pipeline_mode<synchronous>, transform_indices = @transform_1, window_bounds = array<i64: 12, 16>}, {pipeline_mode = #tpu.pipeline_mode<synchronous>, transform_indices = @transform_2, window_bounds = array<i64: 16, 8>}, {transform_indices = @transform_3, window_bounds = array<i64: 1, 1, 12, 8>}]} {
    %c0 = arith.constant 0 : index
    %c0_0 = arith.constant 0 : index
    %0 = vector.load %arg3[%c0, %c0_0] : memref<12x16xf32, #tpu.memory_space<vmem>>, vector<12x16xf32>
    %c0_1 = arith.constant 0 : index
    %c0_2 = arith.constant 0 : index
    %c0_3 = arith.constant 0 : index
    %c0_4 = arith.constant 0 : index
    %1 = vector.load %arg2[%c0_1, %c0_2, %c0_3, %c0_4] : memref<1x1x16x16xf32, #tpu.memory_space<vmem>>, vector<1x1x16x16xf32>
    %2 = vector.shape_cast %1 : vector<1x1x16x16xf32> to vector<16x16xf32>
    %cst = arith.constant dense<0.000000e+00> : vector<12x16xf32>
    %3 = tpu.matmul %0, %2, %cst {dimension_numbers = #tpu.dot_dimension_numbers<[1], [0], [0], [1], [0, 0, 1, 1], [], []>} : vector<12x16xf32>, vector<16x16xf32>, vector<12x16xf32> -> vector<12x16xf32>
    %c0_5 = arith.constant 0 : index
    %c0_6 = arith.constant 0 : index
    %4 = vector.load %arg4[%c0_5, %c0_6] : memref<16x8xf32, #tpu.memory_space<vmem>>, vector<16x8xf32>
    %cst_7 = arith.constant dense<0.000000e+00> : vector<12x8xf32>
    %5 = tpu.matmul %3, %4, %cst_7 {dimension_numbers = #tpu.dot_dimension_numbers<[1], [0], [0], [1], [0, 0, 1, 1], [], []>} : vector<12x16xf32>, vector<16x8xf32>, vector<12x8xf32> -> vector<12x8xf32>
    %c0_8 = arith.constant 0 : index
    %c0_9 = arith.constant 0 : index
    %c0_10 = arith.constant 0 : index
    %c0_11 = arith.constant 0 : index
    %6 = vector.load %arg5[%c0_8, %c0_9, %c0_10, %c0_11] : memref<1x1x12x8xf32, #tpu.memory_space<vmem>>, vector<1x1x12x8xf32>
    %7 = vector.shape_cast %6 : vector<1x1x12x8xf32> to vector<12x8xf32>
    %8 = vector.shape_cast %5 : vector<12x8xf32> to vector<1x1x12x8xf32>
    tpu.vector_store %arg5[%c0_8, %c0_9, %c0_10, %c0_11], %8 {strides = array<i32>} : memref<1x1x12x8xf32, #tpu.memory_space<vmem>>, vector<1x1x12x8xf32>,
    return
  }
  func.func @transform_0(%arg0: i32, %arg1: i32) -> (i32, i32, i32, i32) {
    %c0_i32 = arith.constant 0 : i32
    %c0_i32_0 = arith.constant 0 : i32
    %c0_i32_1 = arith.constant 0 : i32
    return %arg0, %arg1, %c0_i32, %c0_i32_0 : i32, i32, i32, i32
  }
  func.func @transform_1(%arg0: i32, %arg1: i32) -> (i32, i32) {
    %c0_i32 = arith.constant 0 : i32
    %c0_i32_0 = arith.constant 0 : i32
    %c0_i32_1 = arith.constant 0 : i32
    return %c0_i32, %c0_i32_0 : i32, i32
  }
  func.func @transform_2(%arg0: i32, %arg1: i32) -> (i32, i32) {
    %c0_i32 = arith.constant 0 : i32
    %c0_i32_0 = arith.constant 0 : i32
    %c0_i32_1 = arith.constant 0 : i32
    return %c0_i32, %c0_i32_0 : i32, i32
  }
  func.func @transform_3(%arg0: i32, %arg1: i32) -> (i32, i32, i32, i32) {
    %c0_i32 = arith.constant 0 : i32
    %c0_i32_0 = arith.constant 0 : i32
    %c0_i32_1 = arith.constant 0 : i32
    return %arg0, %arg1, %c0_i32, %c0_i32_0 : i32, i32, i32, i32
  }
}

</mosaic_0001>

<llo_original>
// kernel: tpu_custom_call.1
$region0: #{tpu_custom_call.1}
  #allocation0 [shape = 'u32[]', space=smem, size = 0x4, offset = 0x4, fixed_abs, tag = 'smem constant byte address 0x4 - core index']
  #allocation1 [shape = 'u32[144,128]{1,0:T(1,128)}', space=vmem, size = 0x12000, scoped, tag = 'internal scratch']
  %s0 = inlined_call_operand.hbm [shape: f32[2,4,16,16], index: 0, kind: input, shape index: {}]
  %s1 = inlined_call_operand.vmem [shape: f32[12,16], index: 1, kind: input, shape index: {}]
  %s2 = inlined_call_operand.vmem [shape: f32[16,8], index: 2, kind: input, shape index: {}]
  %s3 = inlined_call_operand.vmem [shape: f32[2,4,12,8], index: 3, kind: output, shape index: {}]
  %s4 = sld [smem:[#allocation0]]
  $region49: #{tpu_custom_call.1} parent=0
    _
  %s6 = ssub.s32 1, %s4
  %s7 = scalar_select 0, %s6, %s4
  $region1: #{tpu_custom_call.1} parent=0
    #allocation2 [shape = 'u8[16384]{0}', space=vmem, size = 0x4000, scoped, tag = 'input window, operand 0']
    #allocation3 [shape = 's32[2]{0}', space=sflag, size = 0x8, scoped, tag = 'scoped memory for tpu_custom_call.1']
    %8 = vsyncpa [#allocation3], 0
    %s9 = scalar_lea.sflag [#allocation3], 1
    %10 = vsyncpa %s9, 0
    loop: start=0, step=1, limit=10
    $region2: #{tpu_custom_call.1} parent=1 // loop_pre_header
      _
    $region3: #{tpu_custom_call.1} parent=1 // loop_header
      %s12 = sphi 0, %s16
      %p13 = scmp.ge.s32.totalorder %s12, 10
      %s19 = sphi 0, %s31
      %s20 = sphi 0, %s27
      %s21 = sphi 0, %s19
      %s22 = sphi 0, %s20
      %s23 = sphi 0, %s21
      %s24 = sphi 0, %s22
      %s36 = sphi 0, %s38
      %s39 = sphi 0, %s36
      %s40 = sphi 0, %s39
      %s56 = sphi 0, %s40
      %s60 = sphi 0, %s60
      %s62 = sphi 0, %s60
      %s63 = sphi 0, %s62
      %s77 = sphi 0, %s63
      %s81 = sphi 0, %s81
      %s83 = sphi 0, %s81
      %s84 = sphi 0, %s83
      %s98 = sphi 0, %s84
      %s106 = sphi 0, %s108
      %s109 = sphi 0, %s106
      %s110 = sphi 0, %s109
      %s126 = sphi 0, %s110
    $region4: #{tpu_custom_call.1} parent=1 // loop_header_branch
      %15 = sbr.rel (%p13) target = $region8
    $region5: #{tpu_custom_call.1} parent=1 // loop_body
      %s17 = ssub.s32 %s12, 1
      %s18 = ssub.s32 %s12, 2
      %s25 = sadd.s32 1, %s20
      %p26 = scmp.ge.s32.totalorder %s25, 4
      %s27 = scalar_select %p26, 0, %s25
      %s28 = sadd.s32 1, %s19
      %s29 = scalar_select %p26, %s28, %s19
      %p30 = scmp.ge.s32.totalorder %s29, 2
      %s31 = scalar_select %p30, 0, %s29
      %s32 = ssub.s32 %s19, %s31
      %s33 = ssub.s32 %s20, %s27
      %s34 = sor.u32 %s32, %s33
      %p35 = scmp.eq.s32.totalorder %s34, 0
      %s37 = sadd.s32 %s36, 1
      %s38 = scalar_select %p35, %s36, %s37
      %p41 = pneg %p35
      %p42 = scmp.eq.s32.totalorder %s12, 7
      %p43 = por %p41, %p42
      %p44 = scmp.ne.s32.totalorder %s36, %s39
      %p45 = scmp.eq.s32.totalorder %s12, 0
      %p46 = por %p44, %p45
      %p47 = scmp.ne.s32.totalorder %s36, %s39
      %p48 = scmp.eq.s32.totalorder %s17, 7
      %p49 = por %p47, %p48
      %p50 = scmp.ne.s32.totalorder %s39, %s40
      %p51 = scmp.eq.s32.totalorder %s17, 0
      %p52 = por %p50, %p51
      %p53 = scmp.ne.s32.totalorder %s39, %s40
      %p54 = scmp.eq.s32.totalorder %s18, 7
      %p55 = por %p53, %p54
      %p57 = scmp.ne.s32.totalorder %s40, %s56
      %p58 = scmp.eq.s32.totalorder %s18, 0
      %p59 = por %p57, %p58
      %s61 = sadd.s32 %s60, 1
      %p64 = scmp.eq.s32.totalorder %s12, 7
      %p65 = scmp.ne.s32.totalorder %s60, %s62
      %p66 = scmp.eq.s32.totalorder %s12, 0
      %p67 = por %p65, %p66
      %p68 = scmp.ne.s32.totalorder %s60, %s62
      %p69 = scmp.eq.s32.totalorder %s17, 7
      %p70 = por %p68, %p69
      %p71 = scmp.ne.s32.totalorder %s62, %s63
      %p72 = scmp.eq.s32.totalorder %s17, 0
      %p73 = por %p71, %p72
      %p74 = scmp.ne.s32.totalorder %s62, %s63
      %p75 = scmp.eq.s32.totalorder %s18, 7
      %p76 = por %p74, %p75
      %p78 = scmp.ne.s32.totalorder %s63, %s77
      %p79 = scmp.eq.s32.totalorder %s18, 0
      %p80 = por %p78, %p79
      %s82 = sadd.s32 %s81, 1
      %p85 = scmp.eq.s32.totalorder %s12, 7
      %p86 = scmp.ne.s32.totalorder %s81, %s83
      %p87 = scmp.eq.s32.totalorder %s12, 0
      %p88 = por %p86, %p87
      %p89 = scmp.ne.s32.totalorder %s81, %s83
      %p90 = scmp.eq.s32.totalorder %s17, 7
      %p91 = por %p89, %p90
      %p92 = scmp.ne.s32.totalorder %s83, %s84
      %p93 = scmp.eq.s32.totalorder %s17, 0
      %p94 = por %p92, %p93
      %p95 = scmp.ne.s32.totalorder %s83, %s84
      %p96 = scmp.eq.s32.totalorder %s18, 7
      %p97 = por %p95, %p96
      %p99 = scmp.ne.s32.totalorder %s84, %s98
      %p100 = scmp.eq.s32.totalorder %s18, 0
      %p101 = por %p99, %p100
      %s102 = ssub.s32 %s19, %s31
      %s103 = ssub.s32 %s20, %s27
      %s104 = sor.u32 %s102, %s103
      %p105 = scmp.eq.s32.totalorder %s104, 0
      %s107 = sadd.s32 %s106, 1
      %s108 = scalar_select %p105, %s106, %s107
      %p111 = pneg %p105
      %p112 = scmp.eq.s32.totalorder %s12, 7
      %p113 = por %p111, %p112
      %p114 = scmp.ne.s32.totalorder %s106, %s109
      %p115 = scmp.eq.s32.totalorder %s12, 0
      %p116 = por %p114, %p115
      %p117 = scmp.ne.s32.totalorder %s106, %s109
      %p118 = scmp.eq.s32.totalorder %s17, 7
      %p119 = por %p117, %p118
      %p120 = scmp.ne.s32.totalorder %s109, %s110
      %p121 = scmp.eq.s32.totalorder %s17, 0
      %p122 = por %p120, %p121
      %p123 = scmp.ne.s32.totalorder %s109, %s110
      %p124 = scmp.eq.s32.totalorder %s18, 7
      %p125 = por %p123, %p124
      %p127 = scmp.ne.s32.totalorder %s110, %s126
      %p128 = scmp.eq.s32.totalorder %s18, 0
      %p129 = por %p127, %p128
      %p130 = scmp.le.s32.totalorder 1, %s12
      %p131 = scmp.lt.s32.totalorder %s12, 9
      %p132 = pnand %p130, %p131
      %p133 = pneg %p132
      // Predicated region
      $region9: #{tpu_custom_call.1} parent=5 // pred_check
        _
      $region10: #{tpu_custom_call.1} parent=5 // pred_check_branch
        %135 = sbr.rel (%p132) target = $region12
      $region11: #{tpu_custom_call.1} parent=5 // pred_region
        %s136 = ssub.s32 %s12, 1
        // Predicated region
        $region13: #{tpu_custom_call.1} parent=11 // pred_check
          %p137 = pneg %p73
        $region14: #{tpu_custom_call.1} parent=11 // pred_check_branch
          %139 = sbr.rel (%p137) target = $region16
        $region15: #{tpu_custom_call.1} parent=11 // pred_region
          _
        $region16: #{tpu_custom_call.1} parent=11 // pred_fallthru
          _
        // Predicated region
        $region17: #{tpu_custom_call.1} parent=11 // pred_check
          %p140 = pneg %p94
        $region18: #{tpu_custom_call.1} parent=11 // pred_check_branch
          %142 = sbr.rel (%p140) target = $region20
        $region19: #{tpu_custom_call.1} parent=11 // pred_region
          _
        $region20: #{tpu_custom_call.1} parent=11 // pred_fallthru
          _
      $region12: #{tpu_custom_call.1} parent=5 // pred_fallthru
        _
      %p143 = scmp.lt.s32.totalorder %s12, 8
      // Predicated region
      $region21: #{tpu_custom_call.1} parent=5 // pred_check
        %p144 = pneg %p143
      $region22: #{tpu_custom_call.1} parent=5 // pred_check_branch
        %146 = sbr.rel (%p144) target = $region24
      $region23: #{tpu_custom_call.1} parent=5 // pred_region
        // Predicated region
        $region25: #{tpu_custom_call.1} parent=23 // pred_check
          %p147 = pneg %p46
        $region26: #{tpu_custom_call.1} parent=23 // pred_check_branch
          %149 = sbr.rel (%p147) target = $region28
        $region27: #{tpu_custom_call.1} parent=23 // pred_region
          %s150 = sand.u32 %s36, 1
          %s151 = scalar_lea.sflag [#allocation3], %s150
          %s152 = sand.u32 %s36, 1
          %s153 = smul.addr %s152, 16
          %s154 = scalar_lea.vmem [#allocation2], %s153
          %s156 = ssub.s32 256, 256
          %157 = vsyncadd %s151, %s156
          %s158 = smul.addr %s20, 2
          %s159 = smul.addr %s19, 8
          %s160 = sadd.s32 %s158, %s159
          %s161 = smul.addr %s160, 128
          %s162 = scalar_lea.hbm %s0, %s161
          %s163 = sshll.u32 %s154, 4
          %s164 = int_to_ptr.vmem [resolvable:$true] %s163
          %169 = dma.hbm_to_vmem [thread:$0]  %s162, 256, %s164, %s151, 128, 128, 8
        $region28: #{tpu_custom_call.1} parent=23 // pred_fallthru
          _
      $region24: #{tpu_custom_call.1} parent=5 // pred_fallthru
        _
      %p170 = scmp.le.s32.totalorder 1, %s12
      %p171 = scmp.lt.s32.totalorder %s12, 9
      %p172 = pnand %p170, %p171
      %p173 = pneg %p172
      // Predicated region
      $region29: #{tpu_custom_call.1} parent=5 // pred_check
        _
      $region30: #{tpu_custom_call.1} parent=5 // pred_check_branch
        %175 = sbr.rel (%p172) target = $region32
      $region31: #{tpu_custom_call.1} parent=5 // pred_region
        %s176 = ssub.s32 %s12, 1
        %s177 = sand.u32 %s39, 1
        %s178 = scalar_lea.sflag [#allocation3], %s177
        %s179 = sand.u32 %s39, 1
        %s180 = smul.addr %s179, 16
        %s181 = scalar_lea.vmem [#allocation2], %s180
        // Predicated region
        $region33: #{tpu_custom_call.1} parent=31 // pred_check
          %p182 = pneg %p52
        $region34: #{tpu_custom_call.1} parent=31 // pred_check_branch
          %184 = sbr.rel (%p182) target = $region36
        $region35: #{tpu_custom_call.1} parent=31 // pred_region
          %185 = dma.done %s178, 256
        $region36: #{tpu_custom_call.1} parent=31 // pred_fallthru
          _
        %s186 = sand.u32 %s39, 1
        %s187 = scalar_lea.sflag [#allocation3], %s186
        %s188 = sand.u32 %s39, 1
        %s189 = smul.addr %s188, 16
        %s190 = scalar_lea.vmem [#allocation2], %s189
        %p191 = pneg %p52
        %p192 = pneg %p49
        %p193 = pneg %p73
        %p194 = pneg %p70
        %p195 = pneg %p94
        %p196 = pneg %p91
        %p197 = pneg %p122
        %p198 = pneg %p119
        %p199 = scmp.lt.s32.totalorder %s21, 1
        %s200 = scalar_select %p199, %s21, 1
        %p201 = scmp.lt.s32.totalorder %s22, 3
        %s202 = scalar_select %p201, %s22, 3
        %s203 = smul.addr %s202, 2
        %s204 = smul.addr %s200, 8
        %s205 = sadd.s32 %s203, %s204
        %s206 = smul.addr %s205, 8
        %s207 = scalar_lea.vmem %s3, %s206
        %p208 = scmp.lt.s32.totalorder %s21, 1
        %s209 = scalar_select %p208, %s21, 1
        %p210 = scmp.lt.s32.totalorder %s22, 3
        %s211 = scalar_select %p210, %s22, 3
        %s212 = smul.addr %s211, 2
        %s213 = smul.addr %s209, 8
        %s214 = sadd.s32 %s212, %s213
        %s215 = smul.addr %s214, 8
        %s216 = scalar_lea.vmem %s3, %s215
        %v217 = vld [vmem:[%s1] sm:$0xff]
        %v218 = vld [vmem:[%s1 + $0x8] sm:$0xf]
        %v219 = vld [vmem:[%s181] sm:$0xff]
        %v220 = vld [vmem:[%s181 + $0x8] sm:$0xff]
        %vm221 = vcmask 130048
        %v223 = vsel %vm221, %v217, 0
        %v226 = vsel %vm221, %v218, 0
        %228 = vmatprep.subr.mxu0 0.0
        %229 = vmatpush1.msra.mxu0 %v219
        %230 = vmatprep.subr.mxu0 0.0
        %231 = vmatpush1.msra.mxu0 %v220
        %232 = vmatprep.subr.mxu0 0.0
        %233 = vmatpush1.msra.mxu0 0.0
        %234 = vmatprep.subr.mxu0 0.0
        %235 = vmatpush1.msra.mxu0 0.0
        %236 = vmatprep.subr.mxu0 0.0
        %237 = vmatpush1.msra.mxu0 0.0
        %238 = vmatprep.subr.mxu0 0.0
        %239 = vmatpush1.msra.mxu0 0.0
        %240 = vmatprep.subr.mxu0 0.0
        %241 = vmatpush1.msra.mxu0 0.0
        %242 = vmatprep.subr.mxu0 0.0
        %243 = vmatpush1.msra.mxu0 0.0
        %244 = vmatprep.subr.mxu0 0.0
        %245 = vmatpush1.msra.mxu0 0.0
        %246 = vmatprep.subr.mxu0 0.0
        %247 = vmatpush1.msra.mxu0 0.0
        %248 = vmatprep.subr.mxu0 0.0
        %249 = vmatpush1.msra.mxu0 0.0
        %250 = vmatprep.subr.mxu0 0.0
        %251 = vmatpush1.msra.mxu0 0.0
        %252 = vmatprep.subr.mxu0 0.0
        %253 = vmatpush1.msra.mxu0 0.0
        %254 = vmatprep.subr.mxu0 0.0
        %255 = vmatpush1.msra.mxu0 0.0
        %256 = vmatprep.subr.mxu0 0.0
        %257 = vmatpush1.msra.mxu0 0.0
        %258 = vmatprep.subr.mxu0 0.0
        %259 = vmatpush1.msra.mxu0 0.0
        %260 = vmatprep.subr.mxu0 0.0
        %261 = vmatpush1.msra.mxu0 0.0
        %262 = vmatprep.subr.mxu0 0.0
        %263 = vmatpush1.msra.mxu0 0.0
        %264 = vmatprep.subr.mxu0 0.0
        %265 = vmatpush1.msra.mxu0 0.0
        %266 = vmatprep.subr.mxu0 0.0
        %267 = vmatpush1.msra.mxu0 0.0
        %268 = vmatprep.subr.mxu0 0.0
        %269 = vmatpush1.msra.mxu0 0.0
        %270 = vmatprep.subr.mxu0 0.0
        %271 = vmatpush1.msra.mxu0 0.0
        %272 = vmatprep.subr.mxu0 0.0
        %273 = vmatpush1.msra.mxu0 0.0
        %274 = vmatprep.subr.mxu0 0.0
        %275 = vmatpush1.msra.mxu0 0.0
        %276 = vmatprep.subr.mxu0 0.0
        %277 = vmatpush1.msra.mxu0 0.0
        %278 = vmatprep.subr.mxu0 0.0
        %279 = vmatpush1.msra.mxu0 0.0
        %280 = vmatprep.subr.mxu0 0.0
        %281 = vmatpush1.msra.mxu0 0.0
        %282 = vmatprep.subr.mxu0 0.0
        %283 = vmatpush1.msra.mxu0 0.0
        %284 = vmatprep.subr.mxu0 0.0
        %285 = vmatpush1.msra.mxu0 0.0
        %286 = vmatprep.subr.mxu0 0.0
        %287 = vmatpush1.msra.mxu0 0.0
        %288 = vmatprep.subr.mxu0 0.0
        %289 = vmatpush1.msra.mxu0 0.0
        %290 = vmatprep.subr.mxu0 0.0
        %291 = vmatpush1.msra.mxu0 0.0
        %292 = vmatprep.mubr.f32.mxu0 0.0
        %293 = vmatmul.mubr.f32.gmra.mrb[0].mxu0 %v223
        %v294 = vpop.f32.mrb[0].mxu0
        %v295 = vadd.f32 0.0, %v294
        %v296 = vpop.f32.mrb[0].mxu0
        %297 = vmatprep.mubr.f32.mxu0 0.0
        %298 = vmatmul.mubr.f32.gmra.mrb[0].mxu0 %v226
        %v299 = vpop.f32.mrb[0].mxu0
        %v300 = vadd.f32 0.0, %v299
        %v301 = vpop.f32.mrb[0].mxu0
        %302 = vdwg.mxu0
        %v303 = vld [vmem:[%s2] sm:$0xff]
        %v304 = vld [vmem:[%s2 + $0x8] sm:$0xff]
        %v306 = vsel %vm221, %v295, 0
        %v309 = vsel %vm221, %v300, 0
        %311 = vmatprep.subr.mxu0 0.0
        %312 = vmatpush1.msra.mxu0 %v303
        %313 = vmatprep.subr.mxu0 0.0
        %314 = vmatpush1.msra.mxu0 %v304
        %315 = vmatprep.subr.mxu0 0.0
        %316 = vmatpush1.msra.mxu0 0.0
        %317 = vmatprep.subr.mxu0 0.0
        %318 = vmatpush1.msra.mxu0 0.0
        %319 = vmatprep.subr.mxu0 0.0
        %320 = vmatpush1.msra.mxu0 0.0
        %321 = vmatprep.subr.mxu0 0.0
        %322 = vmatpush1.msra.mxu0 0.0
        %323 = vmatprep.subr.mxu0 0.0
        %324 = vmatpush1.msra.mxu0 0.0
        %325 = vmatprep.subr.mxu0 0.0
        %326 = vmatpush1.msra.mxu0 0.0
        %327 = vmatprep.subr.mxu0 0.0
        %328 = vmatpush1.msra.mxu0 0.0
        %329 = vmatprep.subr.mxu0 0.0
        %330 = vmatpush1.msra.mxu0 0.0
        %331 = vmatprep.subr.mxu0 0.0
        %332 = vmatpush1.msra.mxu0 0.0
        %333 = vmatprep.subr.mxu0 0.0
        %334 = vmatpush1.msra.mxu0 0.0
        %335 = vmatprep.subr.mxu0 0.0
        %336 = vmatpush1.msra.mxu0 0.0
        %337 = vmatprep.subr.mxu0 0.0
        %338 = vmatpush1.msra.mxu0 0.0
        %339 = vmatprep.subr.mxu0 0.0
        %340 = vmatpush1.msra.mxu0 0.0
        %341 = vmatprep.subr.mxu0 0.0
        %342 = vmatpush1.msra.mxu0 0.0
        %343 = vmatprep.subr.mxu0 0.0
        %344 = vmatpush1.msra.mxu0 0.0
        %345 = vmatprep.subr.mxu0 0.0
        %346 = vmatpush1.msra.mxu0 0.0
        %347 = vmatprep.subr.mxu0 0.0
        %348 = vmatpush1.msra.mxu0 0.0
        %349 = vmatprep.subr.mxu0 0.0
        %350 = vmatpush1.msra.mxu0 0.0
        %351 = vmatprep.subr.mxu0 0.0
        %352 = vmatpush1.msra.mxu0 0.0
        %353 = vmatprep.subr.mxu0 0.0
        %354 = vmatpush1.msra.mxu0 0.0
        %355 = vmatprep.subr.mxu0 0.0
        %356 = vmatpush1.msra.mxu0 0.0
        %357 = vmatprep.subr.mxu0 0.0
        %358 = vmatpush1.msra.mxu0 0.0
        %359 = vmatprep.subr.mxu0 0.0
        %360 = vmatpush1.msra.mxu0 0.0
        %361 = vmatprep.subr.mxu0 0.0
        %362 = vmatpush1.msra.mxu0 0.0
        %363 = vmatprep.subr.mxu0 0.0
        %364 = vmatpush1.msra.mxu0 0.0
        %365 = vmatprep.subr.mxu0 0.0
        %366 = vmatpush1.msra.mxu0 0.0
        %367 = vmatprep.subr.mxu0 0.0
        %368 = vmatpush1.msra.mxu0 0.0
        %369 = vmatprep.subr.mxu0 0.0
        %370 = vmatpush1.msra.mxu0 0.0
        %371 = vmatprep.subr.mxu0 0.0
        %372 = vmatpush1.msra.mxu0 0.0
        %373 = vmatprep.subr.mxu0 0.0
        %374 = vmatpush1.msra.mxu0 0.0
        %375 = vmatprep.mubr.f32.mxu0 0.0
        %376 = vmatmul.mubr.f32.gmra.mrb[0].mxu0 %v306
        %v377 = vpop.f32.mrb[0].mxu0
        %v378 = vadd.f32 0.0, %v377
        %v379 = vpop.f32.mrb[0].mxu0
        %380 = vmatprep.mubr.f32.mxu0 0.0
        %381 = vmatmul.mubr.f32.gmra.mrb[0].mxu0 %v309
        %v382 = vpop.f32.mrb[0].mxu0
        %v383 = vadd.f32 0.0, %v382
        %v384 = vpop.f32.mrb[0].mxu0
        %385 = vdwg.mxu0
        %vm386 = vcmask 64512
        %387 = vst.msk [vmem:[%s216] sm:$0xff] %vm386, %v378
        %vm388 = vcmask 60416
        %389 = vst.msk [vmem:[%s216 + $0x8] sm:$0xf] %vm388, %v383
        %p390 = scmp.lt.s32.totalorder %s21, 1
        %s391 = scalar_select %p390, %s21, 1
        %p392 = scmp.lt.s32.totalorder %s22, 3
        %s393 = scalar_select %p392, %s22, 3
        %s394 = smul.addr %s393, 2
        %s395 = smul.addr %s391, 8
        %s396 = sadd.s32 %s394, %s395
        %s397 = smul.addr %s396, 8
        %s398 = scalar_lea.vmem %s3, %s397
        // Predicated region
        $region37: #{tpu_custom_call.1} parent=31 // pred_check
          %p399 = pneg %p119
        $region38: #{tpu_custom_call.1} parent=31 // pred_check_branch
          %401 = sbr.rel (%p399) target = $region40
        $region39: #{tpu_custom_call.1} parent=31 // pred_region
          _
        $region40: #{tpu_custom_call.1} parent=31 // pred_fallthru
          _
      $region32: #{tpu_custom_call.1} parent=5 // pred_fallthru
        _
      %p402 = scmp.le.s32.totalorder 2, %s12
      // Predicated region
      $region41: #{tpu_custom_call.1} parent=5 // pred_check
        %p403 = pneg %p402
      $region42: #{tpu_custom_call.1} parent=5 // pred_check_branch
        %405 = sbr.rel (%p403) target = $region44
      $region43: #{tpu_custom_call.1} parent=5 // pred_region
        %s406 = ssub.s32 %s12, 2
        // Predicated region
        $region45: #{tpu_custom_call.1} parent=43 // pred_check
          %p407 = pneg %p125
        $region46: #{tpu_custom_call.1} parent=43 // pred_check_branch
          %409 = sbr.rel (%p407) target = $region48
        $region47: #{tpu_custom_call.1} parent=43 // pred_region
          %p410 = scmp.lt.s32.totalorder %s23, 1
          %s411 = scalar_select %p410, %s23, 1
          %p412 = scmp.lt.s32.totalorder %s24, 3
          %s413 = scalar_select %p412, %s24, 3
          %s414 = smul.addr %s413, 2
          %s415 = smul.addr %s411, 8
          %s416 = sadd.s32 %s414, %s415
          %s417 = smul.addr %s416, 8
          %s418 = scalar_lea.vmem %s3, %s417
        $region48: #{tpu_custom_call.1} parent=43 // pred_fallthru
          _
      $region44: #{tpu_custom_call.1} parent=5 // pred_fallthru
        _
    $region6: #{tpu_custom_call.1} parent=1 // loop_footer
      %s16 = sadd.s32 1, %s12
    $region7: #{tpu_custom_call.1} parent=1 // loop_footer_branch
      %11 = sbr.rel target = $region3
    $region8: #{tpu_custom_call.1} parent=1 // loop_exit
      _
    %419 = vsyncpa [#allocation3], 1
    %s420 = scalar_lea.sflag [#allocation3], 1
    %421 = vsyncpa %s420, 1

</llo_original>
